<compile_context>
chip_gen: v6e
topology: v6e:2x2x1
jax: 0.10.0
libtpu: 0.0.40
codegen_flags: <defaults>
</compile_context>

<pallas_src>
import jax
import jax.numpy as jnp
from jax.experimental import pallas as pl
from jax.experimental.pallas import tpu as pltpu

# Model hyper-parameters (match BaselineModel defaults)
D = 2          # input feature dim
C_OUT = 2      # output classes
C_PAD = 128    # lane-dense padded output width
H = 128        # hidden width
N_HIDDEN = 4   # number of residual hidden layers

GRIDLESS_MAX_ROWS = 2048   # process whole batch in one grid step up to here
LARGE_TILE_B = 512         # batch tile for large N (multiple of 256 and 128)


def _round_up(n, m):
    return ((n + m - 1) // m) * m


def baseline_mlp_kernel(x_ref, inW_ref, inb_ref, W_ref, b_ref,
                        outW_ref, outb_ref, o_ref):
    """One batch tile of the residual MLP.

    x_ref   : (TB, D)
    inW_ref : (D, H)            input projection (buffer `input_W`)
    inb_ref : (1, H)            input bias       (buffer `input_b`)
    W_ref   : (N_HIDDEN, H, H)  stacked fc weights (stored (in, out))
    b_ref   : (N_HIDDEN, 1, H)  stacked fc biases
    outW_ref: (H, C_PAD)        output weight, columns >= C_OUT are zero
    outb_ref: (1, C_PAD)        output bias,   lanes  >= C_OUT are zero
    o_ref   : (TB, C_PAD)
    """
    x = x_ref[...].astype(jnp.float32)      # (TB, D)
    inW = inW_ref[...]                       # (D, H)

    # Input projection: K=2 matmul replaced by D VPU broadcast FMAs
    # (avoids a mostly-empty padded-K MXU pass).
    h = inb_ref[...] + x[:, 0:1] * inW[0:1, :]
    for d in range(1, D):
        h = h + x[:, d:d + 1] * inW[d:d + 1, :]

    # Residual hidden layers: h = h + relu(h @ W_i + b_i)
    # TODO(synk): dropout (p=0.1) is treated as identity (eval mode); masks=None path only.
    for i in range(N_HIDDEN):
        z = jnp.dot(h, W_ref[i], preferred_element_type=jnp.float32) + b_ref[i]
        h = h + jnp.maximum(z, 0.0)

    # Output layer into 128 padded lanes -> unmasked stores.
    y = jnp.dot(h, outW_ref[...], preferred_element_type=jnp.float32) + outb_ref[...]
    o_ref[...] = y.astype(o_ref.dtype)


def baseline_model_forward(x, params, tile_b=None):
    """x: (N, D) float32 -> (N, C_OUT) float32."""
    inW, inb, Ws, bs, outW, outb = params
    N = x.shape[0]

    # Lane-dense output: pad (H, C_OUT) -> (H, C_PAD) with zero columns.
    outW_p = jnp.zeros((H, C_PAD), jnp.float32).at[:, :C_OUT].set(outW)
    outb_p = jnp.zeros((1, C_PAD), jnp.float32).at[:, :C_OUT].set(outb)

    # Adaptive batch tile: gridless (single step) for small/medium N,
    # 512-row tiles otherwise (>=2 steps so v7x megacore engages both TCs).
    if tile_b is None:
        if N <= GRIDLESS_MAX_ROWS:
            tile_b = _round_up(max(N, 8), 8)
        else:
            tile_b = LARGE_TILE_B
    n_pad = _round_up(N, tile_b)
    if n_pad != N:
        x = jnp.pad(x, ((0, n_pad - N), (0, 0)))
    grid = (n_pad // tile_b,)

    out = pl.pallas_call(
        baseline_mlp_kernel,
        out_shape=jax.ShapeDtypeStruct((n_pad, C_PAD), jnp.float32),
        grid_spec=pltpu.PrefetchScalarGridSpec(
            num_scalar_prefetch=0,
            grid=grid,
            in_specs=[
                pl.BlockSpec((tile_b, D), lambda i: (i, 0)),              # x tile
                pl.BlockSpec((D, H), lambda i: (0, 0)),                   # input_W
                pl.BlockSpec((1, H), lambda i: (0, 0)),                   # input_b
                pl.BlockSpec((N_HIDDEN, H, H), lambda i: (0, 0, 0)),      # fc weights
                pl.BlockSpec((N_HIDDEN, 1, H), lambda i: (0, 0, 0)),      # fc biases
                pl.BlockSpec((H, C_PAD), lambda i: (0, 0)),               # output W (padded)
                pl.BlockSpec((1, C_PAD), lambda i: (0, 0)),               # output b (padded)
            ],
            out_specs=pl.BlockSpec((tile_b, C_PAD), lambda i: (i, 0)),
        ),
        compiler_params=pltpu.CompilerParams(
            dimension_semantics=("parallel",)),
    )(x, inW, inb, Ws, bs, outW_p, outb_p)

    return out[:N, :C_OUT]


def init_params(key):
    """Deterministic synthetic parameters matching BaselineModel shapes."""
    keys = jax.random.split(key, 4 + 2 * N_HIDDEN)
    inW = jax.random.normal(keys[0], (D, H), jnp.float32)        # register_buffer input_W
    inb = jax.random.normal(keys[1], (H,), jnp.float32).reshape(1, H)

    bound = 1.0 / jnp.sqrt(H)
    Ws = jnp.stack([
        jax.random.uniform(keys[2 + i], (H, H), jnp.float32, -bound, bound)
        for i in range(N_HIDDEN)
    ])  # (N_HIDDEN, H, H), stored (in, out)
    bs = jnp.stack([
        jax.random.uniform(keys[2 + N_HIDDEN + i], (1, H), jnp.float32, -bound, bound)
        for i in range(N_HIDDEN)
    ])  # (N_HIDDEN, 1, H)

    outW = jax.random.uniform(keys[2 + 2 * N_HIDDEN], (H, C_OUT),
                              jnp.float32, -bound, bound)          # (H, C) == torch (C,H).T
    outb = jax.random.uniform(keys[3 + 2 * N_HIDDEN], (1, C_OUT),
                              jnp.float32, -bound, bound)
    return inW, inb, Ws, bs, outW, outb


def reference_forward(x, params):
    """Pure-JAX reference for correctness check."""
    inW, inb, Ws, bs, outW, outb = params
    h = x @ inW + inb
    for i in range(N_HIDDEN):
        h = h + jax.nn.relu(h @ Ws[i] + bs[i])
    return h @ outW + outb


if __name__ == "__main__":
    key = jax.random.PRNGKey(0)
    k_params, k_x1, k_x2 = jax.random.split(key, 3)
    params = init_params(k_params)

    # Small, tile-aligned batch (gridless single-step path).
    N1 = 8
    x1 = jax.random.normal(k_x1, (N1, D), jnp.float32)
    out1 = jax.block_until_ready(baseline_model_forward(x1, params))
    ref1 = reference_forward(x1, params)
    assert out1.shape == (N1, C_OUT)
    assert jnp.allclose(out1, ref1, atol=1e-4, rtol=1e-4), "mismatch vs reference (N=8)"

    # Non-multiple-of-8 batch exercises the wrapper padding path.
    N2 = 10
    x2 = jax.random.normal(k_x2, (N2, D), jnp.float32)
    out2 = jax.block_until_ready(baseline_model_forward(x2, params))
    ref2 = reference_forward(x2, params)
    assert out2.shape == (N2, C_OUT)
    assert jnp.allclose(out2, ref2, atol=1e-4, rtol=1e-4), "mismatch vs reference (N=10)"

    print("KERNEL_OK")
</pallas_src>

<mosaic_0001>
module attributes {stable_mosaic.version = 11 : i64} {
  func.func @baseline_mlp_kernel(%arg0: i32, %arg1: memref<8x2xf32, #tpu.memory_space<vmem>>, %arg2: memref<2x128xf32, #tpu.memory_space<vmem>>, %arg3: memref<1x128xf32, #tpu.memory_space<vmem>>, %arg4: memref<4x128x128xf32, #tpu.memory_space<vmem>>, %arg5: memref<4x1x128xf32, #tpu.memory_space<vmem>>, %arg6: memref<128x128xf32, #tpu.memory_space<vmem>>, %arg7: memref<1x128xf32, #tpu.memory_space<vmem>>, %arg8: memref<8x128xf32, #tpu.memory_space<vmem>>) attributes {dimension_semantics = [#tpu.dimension_semantics<parallel>], iteration_bounds = array<i64: 1>, scalar_prefetch = 0 : i64, scratch_operands = 0 : i64, tpu.core_type = #tpu.core_type<tc>, window_params = [{transform_indices = @transform_0, window_bounds = array<i64: 8, 2>}, {pipeline_mode = #tpu.pipeline_mode<synchronous>, transform_indices = @transform_1, window_bounds = array<i64: 2, 128>}, {pipeline_mode = #tpu.pipeline_mode<synchronous>, transform_indices = @transform_2, window_bounds = array<i64: 1, 128>}, {pipeline_mode = #tpu.pipeline_mode<synchronous>, transform_indices = @transform_3, window_bounds = array<i64: 4, 128, 128>}, {pipeline_mode = #tpu.pipeline_mode<synchronous>, transform_indices = @transform_4, window_bounds = array<i64: 4, 1, 128>}, {pipeline_mode = #tpu.pipeline_mode<synchronous>, transform_indices = @transform_5, window_bounds = array<i64: 128, 128>}, {pipeline_mode = #tpu.pipeline_mode<synchronous>, transform_indices = @transform_6, window_bounds = array<i64: 1, 128>}, {transform_indices = @transform_7, window_bounds = array<i64: 8, 128>}]} {
    %c0 = arith.constant 0 : index
    %c0_0 = arith.constant 0 : index
    %0 = vector.load %arg1[%c0, %c0_0] : memref<8x2xf32, #tpu.memory_space<vmem>>, vector<8x2xf32>
    %c0_1 = arith.constant 0 : index
    %c0_2 = arith.constant 0 : index
    %1 = vector.load %arg2[%c0_1, %c0_2] : memref<2x128xf32, #tpu.memory_space<vmem>>, vector<2x128xf32>
    %c0_3 = arith.constant 0 : index
    %c0_4 = arith.constant 0 : index
    %2 = vector.load %arg3[%c0_3, %c0_4] : memref<1x128xf32, #tpu.memory_space<vmem>>, vector<1x128xf32>
    %3 = vector.extract_strided_slice %0 {offsets = [0, 0], sizes = [8, 1], strides = [1, 1]} : vector<8x2xf32> to vector<8x1xf32>
    %4 = vector.extract_strided_slice %1 {offsets = [0, 0], sizes = [1, 128], strides = [1, 1]} : vector<2x128xf32> to vector<1x128xf32>
    %5 = vector.broadcast %3 : vector<8x1xf32> to vector<8x128xf32>
    %6 = vector.broadcast %4 : vector<1x128xf32> to vector<8x128xf32>
    %7 = arith.mulf %5, %6 : vector<8x128xf32>
    %8 = vector.broadcast %2 : vector<1x128xf32> to vector<8x128xf32>
    %9 = arith.addf %8, %7 : vector<8x128xf32>
    %10 = vector.extract_strided_slice %0 {offsets = [0, 1], sizes = [8, 1], strides = [1, 1]} : vector<8x2xf32> to vector<8x1xf32>
    %11 = vector.extract_strided_slice %1 {offsets = [1, 0], sizes = [1, 128], strides = [1, 1]} : vector<2x128xf32> to vector<1x128xf32>
    %12 = vector.broadcast %10 : vector<8x1xf32> to vector<8x128xf32>
    %13 = vector.broadcast %11 : vector<1x128xf32> to vector<8x128xf32>
    %14 = arith.mulf %12, %13 : vector<8x128xf32>
    %15 = arith.addf %9, %14 : vector<8x128xf32>
    %c0_5 = arith.constant 0 : index
    %c0_6 = arith.constant 0 : index
    %c0_7 = arith.constant 0 : index
    %16 = vector.load %arg4[%c0_5, %c0_6, %c0_7] : memref<4x128x128xf32, #tpu.memory_space<vmem>>, vector<1x128x128xf32>
    %17 = vector.shape_cast %16 : vector<1x128x128xf32> to vector<128x128xf32>
    %cst = arith.constant dense<0.000000e+00> : vector<8x128xf32>
    %18 = tpu.matmul %15, %17, %cst {dimension_numbers = #tpu.dot_dimension_numbers<[1], [0], [0], [1], [0, 0, 1, 1], [], []>} : vector<8x128xf32>, vector<128x128xf32>, vector<8x128xf32> -> vector<8x128xf32>
    %c0_8 = arith.constant 0 : index
    %c0_9 = arith.constant 0 : index
    %c0_10 = arith.constant 0 : index
    %19 = vector.load %arg5[%c0_8, %c0_9, %c0_10] : memref<4x1x128xf32, #tpu.memory_space<vmem>>, vector<1x1x128xf32>
    %20 = vector.shape_cast %19 : vector<1x1x128xf32> to vector<1x128xf32>
    %21 = vector.broadcast %20 : vector<1x128xf32> to vector<8x128xf32>
    %22 = arith.addf %18, %21 : vector<8x128xf32>
    %cst_11 = arith.constant 0.000000e+00 : f32
    %23 = vector.broadcast %cst_11 : f32 to vector<8x128xf32>
    %24 = arith.maximumf %22, %23 : vector<8x128xf32>
    %25 = arith.addf %15, %24 : vector<8x128xf32>
    %c1 = arith.constant 1 : index
    %c0_12 = arith.constant 0 : index
    %c0_13 = arith.constant 0 : index
    %26 = vector.load %arg4[%c1, %c0_12, %c0_13] : memref<4x128x128xf32, #tpu.memory_space<vmem>>, vector<1x128x128xf32>
    %27 = vector.shape_cast %26 : vector<1x128x128xf32> to vector<128x128xf32>
    %cst_14 = arith.constant dense<0.000000e+00> : vector<8x128xf32>
    %28 = tpu.matmul %25, %27, %cst_14 {dimension_numbers = #tpu.dot_dimension_numbers<[1], [0], [0], [1], [0, 0, 1, 1], [], []>} : vector<8x128xf32>, vector<128x128xf32>, vector<8x128xf32> -> vector<8x128xf32>
    %c1_15 = arith.constant 1 : index
    %c0_16 = arith.constant 0 : index
    %c0_17 = arith.constant 0 : index
    %29 = vector.load %arg5[%c1_15, %c0_16, %c0_17] : memref<4x1x128xf32, #tpu.memory_space<vmem>>, vector<1x1x128xf32>
    %30 = vector.shape_cast %29 : vector<1x1x128xf32> to vector<1x128xf32>
    %31 = vector.broadcast %30 : vector<1x128xf32> to vector<8x128xf32>
    %32 = arith.addf %28, %31 : vector<8x128xf32>
    %cst_18 = arith.constant 0.000000e+00 : f32
    %33 = vector.broadcast %cst_18 : f32 to vector<8x128xf32>
    %34 = arith.maximumf %32, %33 : vector<8x128xf32>
    %35 = arith.addf %25, %34 : vector<8x128xf32>
    %c2 = arith.constant 2 : index
    %c0_19 = arith.constant 0 : index
    %c0_20 = arith.constant 0 : index
    %36 = vector.load %arg4[%c2, %c0_19, %c0_20] : memref<4x128x128xf32, #tpu.memory_space<vmem>>, vector<1x128x128xf32>
    %37 = vector.shape_cast %36 : vector<1x128x128xf32> to vector<128x128xf32>
    %cst_21 = arith.constant dense<0.000000e+00> : vector<8x128xf32>
    %38 = tpu.matmul %35, %37, %cst_21 {dimension_numbers = #tpu.dot_dimension_numbers<[1], [0], [0], [1], [0, 0, 1, 1], [], []>} : vector<8x128xf32>, vector<128x128xf32>, vector<8x128xf32> -> vector<8x128xf32>
    %c2_22 = arith.constant 2 : index
    %c0_23 = arith.constant 0 : index
    %c0_24 = arith.constant 0 : index
    %39 = vector.load %arg5[%c2_22, %c0_23, %c0_24] : memref<4x1x128xf32, #tpu.memory_space<vmem>>, vector<1x1x128xf32>
    %40 = vector.shape_cast %39 : vector<1x1x128xf32> to vector<1x128xf32>
    %41 = vector.broadcast %40 : vector<1x128xf32> to vector<8x128xf32>
    %42 = arith.addf %38, %41 : vector<8x128xf32>
    %cst_25 = arith.constant 0.000000e+00 : f32
    %43 = vector.broadcast %cst_25 : f32 to vector<8x128xf32>
    %44 = arith.maximumf %42, %43 : vector<8x128xf32>
    %45 = arith.addf %35, %44 : vector<8x128xf32>
    %c3 = arith.constant 3 : index
    %c0_26 = arith.constant 0 : index
    %c0_27 = arith.constant 0 : index
    %46 = vector.load %arg4[%c3, %c0_26, %c0_27] : memref<4x128x128xf32, #tpu.memory_space<vmem>>, vector<1x128x128xf32>
    %47 = vector.shape_cast %46 : vector<1x128x128xf32> to vector<128x128xf32>
    %cst_28 = arith.constant dense<0.000000e+00> : vector<8x128xf32>
    %48 = tpu.matmul %45, %47, %cst_28 {dimension_numbers = #tpu.dot_dimension_numbers<[1], [0], [0], [1], [0, 0, 1, 1], [], []>} : vector<8x128xf32>, vector<128x128xf32>, vector<8x128xf32> -> vector<8x128xf32>
    %c3_29 = arith.constant 3 : index
    %c0_30 = arith.constant 0 : index
    %c0_31 = arith.constant 0 : index
    %49 = vector.load %arg5[%c3_29, %c0_30, %c0_31] : memref<4x1x128xf32, #tpu.memory_space<vmem>>, vector<1x1x128xf32>
    %50 = vector.shape_cast %49 : vector<1x1x128xf32> to vector<1x128xf32>
    %51 = vector.broadcast %50 : vector<1x128xf32> to vector<8x128xf32>
    %52 = arith.addf %48, %51 : vector<8x128xf32>
    %cst_32 = arith.constant 0.000000e+00 : f32
    %53 = vector.broadcast %cst_32 : f32 to vector<8x128xf32>
    %54 = arith.maximumf %52, %53 : vector<8x128xf32>
    %55 = arith.addf %45, %54 : vector<8x128xf32>
    %c0_33 = arith.constant 0 : index
    %c0_34 = arith.constant 0 : index
    %56 = vector.load %arg6[%c0_33, %c0_34] : memref<128x128xf32, #tpu.memory_space<vmem>>, vector<128x128xf32>
    %cst_35 = arith.constant dense<0.000000e+00> : vector<8x128xf32>
    %57 = tpu.matmul %55, %56, %cst_35 {dimension_numbers = #tpu.dot_dimension_numbers<[1], [0], [0], [1], [0, 0, 1, 1], [], []>} : vector<8x128xf32>, vector<128x128xf32>, vector<8x128xf32> -> vector<8x128xf32>
    %c0_36 = arith.constant 0 : index
    %c0_37 = arith.constant 0 : index
    %58 = vector.load %arg7[%c0_36, %c0_37] : memref<1x128xf32, #tpu.memory_space<vmem>>, vector<1x128xf32>
    %59 = vector.broadcast %58 : vector<1x128xf32> to vector<8x128xf32>
    %60 = arith.addf %57, %59 : vector<8x128xf32>
    %c0_38 = arith.constant 0 : index
    %c0_39 = arith.constant 0 : index
    %61 = vector.load %arg8[%c0_38, %c0_39] : memref<8x128xf32, #tpu.memory_space<vmem>>, vector<8x128xf32>
    tpu.vector_store %arg8[%c0_38, %c0_39], %60 {strides = array<i32>} : memref<8x128xf32, #tpu.memory_space<vmem>>, vector<8x128xf32>,
    return
  }
  func.func @transform_0(%arg0: i32) -> (i32, i32) {
    %c0_i32 = arith.constant 0 : i32
    %c0_i32_0 = arith.constant 0 : i32
    return %arg0, %c0_i32 : i32, i32
  }
  func.func @transform_1(%arg0: i32) -> (i32, i32) {
    %c0_i32 = arith.constant 0 : i32
    %c0_i32_0 = arith.constant 0 : i32
    %c0_i32_1 = arith.constant 0 : i32
    return %c0_i32, %c0_i32_0 : i32, i32
  }
  func.func @transform_2(%arg0: i32) -> (i32, i32) {
    %c0_i32 = arith.constant 0 : i32
    %c0_i32_0 = arith.constant 0 : i32
    %c0_i32_1 = arith.constant 0 : i32
    return %c0_i32, %c0_i32_0 : i32, i32
  }
  func.func @transform_3(%arg0: i32) -> (i32, i32, i32) {
    %c0_i32 = arith.constant 0 : i32
    %c0_i32_0 = arith.constant 0 : i32
    %c0_i32_1 = arith.constant 0 : i32
    %c0_i32_2 = arith.constant 0 : i32
    return %c0_i32, %c0_i32_0, %c0_i32_1 : i32, i32, i32
  }
  func.func @transform_4(%arg0: i32) -> (i32, i32, i32) {
    %c0_i32 = arith.constant 0 : i32
    %c0_i32_0 = arith.constant 0 : i32
    %c0_i32_1 = arith.constant 0 : i32
    %c0_i32_2 = arith.constant 0 : i32
    return %c0_i32, %c0_i32_0, %c0_i32_1 : i32, i32, i32
  }
  func.func @transform_5(%arg0: i32) -> (i32, i32) {
    %c0_i32 = arith.constant 0 : i32
    %c0_i32_0 = arith.constant 0 : i32
    %c0_i32_1 = arith.constant 0 : i32
    return %c0_i32, %c0_i32_0 : i32, i32
  }
  func.func @transform_6(%arg0: i32) -> (i32, i32) {
    %c0_i32 = arith.constant 0 : i32
    %c0_i32_0 = arith.constant 0 : i32
    %c0_i32_1 = arith.constant 0 : i32
    return %c0_i32, %c0_i32_0 : i32, i32
  }
  func.func @transform_7(%arg0: i32) -> (i32, i32) {
    %c0_i32 = arith.constant 0 : i32
    %c0_i32_0 = arith.constant 0 : i32
    return %arg0, %c0_i32 : i32, i32
  }
}

</mosaic_0001>

<llo_original>
// kernel: tpu_custom_call.1
$region0: #{tpu_custom_call.1}
  #allocation0 [shape = 'u32[]', space=smem, size = 0x4, offset = 0x4, fixed_abs, tag = 'smem constant byte address 0x4 - core index']
  #allocation1 [shape = 'u32[144,128]{1,0:T(1,128)}', space=vmem, size = 0x12000, scoped, tag = 'internal scratch']
  %s0 = inlined_call_operand.vmem [shape: f32[8,2], index: 0, kind: input, shape index: {}]
  %s1 = inlined_call_operand.vmem [shape: f32[2,128], index: 1, kind: input, shape index: {}]
  %s2 = inlined_call_operand.vmem [shape: f32[1,128], index: 2, kind: input, shape index: {}]
  %s3 = inlined_call_operand.hbm [shape: f32[4,128,128], index: 3, kind: input, shape index: {}]
  %s4 = inlined_call_operand.vmem [shape: f32[4,1,128], index: 4, kind: input, shape index: {}]
  %s5 = inlined_call_operand.hbm [shape: f32[128,128], index: 5, kind: input, shape index: {}]
  %s6 = inlined_call_operand.vmem [shape: f32[1,128], index: 6, kind: input, shape index: {}]
  %s7 = inlined_call_operand.hbm [shape: f32[8,128], index: 7, kind: output, shape index: {}]
  %s8 = sld [smem:[#allocation0]]
  $region46: #{tpu_custom_call.1} parent=0
    _
  %s10 = ssub.s32 1, %s8
  %s11 = scalar_select 0, %s10, %s8
  $region1: #{tpu_custom_call.1} parent=0
    #allocation2 [shape = 'u8[262144]{0}', space=vmem, size = 0x40000, scoped, tag = 'input window, operand 3, single buffered']
    #allocation3 [shape = 's32[1]{0}', space=sflag, size = 0x4, scoped, tag = 'scoped memory for tpu_custom_call.1']
    #allocation4 [shape = 's32[1]{0}', space=sflag, size = 0x4, scoped, tag = 'scoped memory for tpu_custom_call.1']
    #allocation5 [shape = 'u8[65536]{0}', space=vmem, size = 0x10000, scoped, tag = 'input window, operand 5, single buffered']
    #allocation6 [shape = 's32[1]{0}', space=sflag, size = 0x4, scoped, tag = 'scoped memory for tpu_custom_call.1']
    #allocation7 [shape = 'u8[4096]{0}', space=vmem, size = 0x1000, scoped, tag = 'output window, operand 0, single buffered']
    %12 = vsyncpa [#allocation3], 0
    %13 = vsyncpa [#allocation6], 0
    %14 = vsyncpa [#allocation4], 0
    // Predicated region
    $region2: #{tpu_custom_call.1} parent=1 // pred_check
      _
    $region3: #{tpu_custom_call.1} parent=1 // pred_check_branch
      %16 = sbr.rel (0) target = $region5
    $region4: #{tpu_custom_call.1} parent=1 // pred_region
      _
    $region5: #{tpu_custom_call.1} parent=1 // pred_fallthru
      _
    // Predicated region
    $region6: #{tpu_custom_call.1} parent=1 // pred_check
      _
    $region7: #{tpu_custom_call.1} parent=1 // pred_check_branch
      %18 = sbr.rel (0) target = $region9
    $region8: #{tpu_custom_call.1} parent=1 // pred_region
      _
    $region9: #{tpu_custom_call.1} parent=1 // pred_fallthru
      _
    // Predicated region
    $region10: #{tpu_custom_call.1} parent=1 // pred_check
      _
    $region11: #{tpu_custom_call.1} parent=1 // pred_check_branch
      %20 = sbr.rel (0) target = $region13
    $region12: #{tpu_custom_call.1} parent=1 // pred_region
      _
    $region13: #{tpu_custom_call.1} parent=1 // pred_fallthru
      _
    // Predicated region
    $region14: #{tpu_custom_call.1} parent=1 // pred_check
      _
    $region15: #{tpu_custom_call.1} parent=1 // pred_check_branch
      %22 = sbr.rel (0) target = $region17
    $region16: #{tpu_custom_call.1} parent=1 // pred_region
      %s24 = ssub.s32 8192, 8192
      %25 = vsyncadd [#allocation3], %s24
      %s26 = sshll.u32 [#allocation2], 4
      %s27 = int_to_ptr.vmem [resolvable:$true] %s26
      %32 = dma.hbm_to_vmem [thread:$0]  %s3, 8192, %s27, [#allocation3], 128, 128, 8
    $region17: #{tpu_custom_call.1} parent=1 // pred_fallthru
      _
    // Predicated region
    $region18: #{tpu_custom_call.1} parent=1 // pred_check
      _
    $region19: #{tpu_custom_call.1} parent=1 // pred_check_branch
      %34 = sbr.rel (0) target = $region21
    $region20: #{tpu_custom_call.1} parent=1 // pred_region
      _
    $region21: #{tpu_custom_call.1} parent=1 // pred_fallthru
      _
    // Predicated region
    $region22: #{tpu_custom_call.1} parent=1 // pred_check
      _
    $region23: #{tpu_custom_call.1} parent=1 // pred_check_branch
      %36 = sbr.rel (0) target = $region25
    $region24: #{tpu_custom_call.1} parent=1 // pred_region
      %s38 = ssub.s32 2048, 2048
      %39 = vsyncadd [#allocation6], %s38
      %s40 = sshll.u32 [#allocation5], 4
      %s41 = int_to_ptr.vmem [resolvable:$true] %s40
      %46 = dma.hbm_to_vmem [thread:$0]  %s5, 2048, %s41, [#allocation6], 128, 128, 8
    $region25: #{tpu_custom_call.1} parent=1 // pred_fallthru
      _
    // Predicated region
    $region26: #{tpu_custom_call.1} parent=1 // pred_check
      _
    $region27: #{tpu_custom_call.1} parent=1 // pred_check_branch
      %48 = sbr.rel (0) target = $region29
    $region28: #{tpu_custom_call.1} parent=1 // pred_region
      _
    $region29: #{tpu_custom_call.1} parent=1 // pred_fallthru
      _
    // Predicated region
    $region30: #{tpu_custom_call.1} parent=1 // pred_check
      _
    $region31: #{tpu_custom_call.1} parent=1 // pred_check_branch
      %50 = sbr.rel (0) target = $region33
    $region32: #{tpu_custom_call.1} parent=1 // pred_region
      %51 = dma.done [#allocation3], 8192
    $region33: #{tpu_custom_call.1} parent=1 // pred_fallthru
      _
    // Predicated region
    $region34: #{tpu_custom_call.1} parent=1 // pred_check
      _
    $region35: #{tpu_custom_call.1} parent=1 // pred_check_branch
      %53 = sbr.rel (0) target = $region37
    $region36: #{tpu_custom_call.1} parent=1 // pred_region
      %54 = dma.done [#allocation6], 2048
    $region37: #{tpu_custom_call.1} parent=1 // pred_fallthru
      _
    %v55 = vld [vmem:[%s0] sm:$0xff]
    %v56 = vld [vmem:[%s1] sm:$0x3]
    %v57 = vld [vmem:[%s2] sm:$0x1]
    %59 = vset.pattern.permute.xlu0 0
    %60 = vperm.xlu0 %59, %v55
    %v61 = vpop.permute.xlu0 %60
    %v63 = vlaneseq
    %v64 = vshrl.u32 %v63, 7
    %v65 = vsub.s32 0, %v64
    %v66 = vrot.slane %v56, %v65
    %v67 = vmul.f32 %v61, %v66
    %v69 = vlaneseq
    %v70 = vshrl.u32 %v69, 7
    %v71 = vsub.s32 0, %v70
    %v72 = vrot.slane %v57, %v71
    %v74 = vadd.f32 %v72, %v67
    %75 = vset.pattern.permute.xlu0 1
    %76 = vperm.xlu0 %75, %v55
    %v77 = vpop.permute.xlu0 %76
    %v79 = vlaneseq
    %v80 = vshrl.u32 %v79, 7
    %v81 = vsub.s32 1, %v80
    %v82 = vrot.slane %v56, %v81
    %v83 = vmul.f32 %v77, %v82
    %v84 = vadd.f32 %v74, %v83
    %v85 = vld [vmem:[#allocation2] sm:$0xff]
    %v86 = vld [vmem:[#allocation2 + $0x8] sm:$0xff]
    %v87 = vld [vmem:[#allocation2 + $0x10] sm:$0xff]
    %v88 = vld [vmem:[#allocation2 + $0x18] sm:$0xff]
    %v89 = vld [vmem:[#allocation2 + $0x20] sm:$0xff]
    %v90 = vld [vmem:[#allocation2 + $0x28] sm:$0xff]
    %v91 = vld [vmem:[#allocation2 + $0x30] sm:$0xff]
    %v92 = vld [vmem:[#allocation2 + $0x38] sm:$0xff]
    %v93 = vld [vmem:[#allocation2 + $0x40] sm:$0xff]
    %v94 = vld [vmem:[#allocation2 + $0x48] sm:$0xff]
    %v95 = vld [vmem:[#allocation2 + $0x50] sm:$0xff]
    %v96 = vld [vmem:[#allocation2 + $0x58] sm:$0xff]
    %v97 = vld [vmem:[#allocation2 + $0x60] sm:$0xff]
    %v98 = vld [vmem:[#allocation2 + $0x68] sm:$0xff]
    %v99 = vld [vmem:[#allocation2 + $0x70] sm:$0xff]
    %v100 = vld [vmem:[#allocation2 + $0x78] sm:$0xff]
    %v101 = vld [vmem:[%s4] sm:$0x1]
    %v103 = vlaneseq
    %v104 = vshrl.u32 %v103, 7
    %v105 = vsub.s32 0, %v104
    %v106 = vrot.slane %v101, %v105
    %108 = vmatprep.subr.mxu0 0.0
    %109 = vmatpush1.msra.mxu0 %v100
    %110 = vmatprep.subr.mxu0 0.0
    %111 = vmatpush1.msra.mxu0 %v99
    %112 = vmatprep.subr.mxu0 0.0
    %113 = vmatpush1.msra.mxu0 %v98
    %114 = vmatprep.subr.mxu0 0.0
    %115 = vmatpush1.msra.mxu0 %v97
    %116 = vmatprep.subr.mxu0 0.0
    %117 = vmatpush1.msra.mxu0 %v96
    %118 = vmatprep.subr.mxu0 0.0
    %119 = vmatpush1.msra.mxu0 %v95
    %120 = vmatprep.subr.mxu0 0.0
    %121 = vmatpush1.msra.mxu0 %v94
    %122 = vmatprep.subr.mxu0 0.0
    %123 = vmatpush1.msra.mxu0 %v93
    %124 = vmatprep.subr.mxu0 0.0
    %125 = vmatpush1.msra.mxu0 %v92
    %126 = vmatprep.subr.mxu0 0.0
    %127 = vmatpush1.msra.mxu0 %v91
    %128 = vmatprep.subr.mxu0 0.0
    %129 = vmatpush1.msra.mxu0 %v90
    %130 = vmatprep.subr.mxu0 0.0
    %131 = vmatpush1.msra.mxu0 %v89
    %132 = vmatprep.subr.mxu0 0.0
    %133 = vmatpush1.msra.mxu0 %v88
    %134 = vmatprep.subr.mxu0 0.0
    %135 = vmatpush1.msra.mxu0 %v87
    %136 = vmatprep.subr.mxu0 0.0
    %137 = vmatpush1.msra.mxu0 %v86
    %138 = vmatprep.subr.mxu0 0.0
    %139 = vmatpush1.msra.mxu0 %v85
    %140 = vmatprep.subr.mxu0 0.0
    %141 = vmatpush2.msra.mxu0 0.0
    %142 = vmatprep.subr.mxu0 0.0
    %143 = vmatpush2.msra.mxu0 0.0
    %144 = vmatprep.subr.mxu0 0.0
    %145 = vmatpush2.msra.mxu0 0.0
    %146 = vmatprep.subr.mxu0 0.0
    %147 = vmatpush2.msra.mxu0 0.0
    %148 = vmatprep.subr.mxu0 0.0
    %149 = vmatpush2.msra.mxu0 0.0
    %150 = vmatprep.subr.mxu0 0.0
    %151 = vmatpush2.msra.mxu0 0.0
    %152 = vmatprep.subr.mxu0 0.0
    %153 = vmatpush2.msra.mxu0 0.0
    %154 = vmatprep.subr.mxu0 0.0
    %155 = vmatpush2.msra.mxu0 0.0
    %156 = vmatprep.subr.mxu0 0.0
    %157 = vmatpush2.msra.mxu0 0.0
    %158 = vmatprep.subr.mxu0 0.0
    %159 = vmatpush2.msra.mxu0 0.0
    %160 = vmatprep.subr.mxu0 0.0
    %161 = vmatpush2.msra.mxu0 0.0
    %162 = vmatprep.subr.mxu0 0.0
    %163 = vmatpush2.msra.mxu0 0.0
    %164 = vmatprep.subr.mxu0 0.0
    %165 = vmatpush2.msra.mxu0 0.0
    %166 = vmatprep.subr.mxu0 0.0
    %167 = vmatpush2.msra.mxu0 0.0
    %168 = vmatprep.subr.mxu0 0.0
    %169 = vmatpush2.msra.mxu0 0.0
    %170 = vmatprep.subr.mxu0 0.0
    %171 = vmatpush2.msra.mxu0 0.0
    %172 = vmatprep.mubr.f32.mxu0 0.0
    %173 = vmatmul.mubr.f32.gmra.mxu0 %v84
    %v174 = vpop.f32.mrf.mxu0
    %v175 = vadd.f32 %v106, %v174
    %v176 = vpop.f32.mrf.mxu0
    %177 = vdwg.mxu0
    %v178 = vmax.f32 %v175, 0.0
    %v179 = vadd.f32 %v84, %v178
    %s180 = scalar_lea.vmem [#allocation2], 128
    %v181 = vld [vmem:[%s180] sm:$0xff]
    %v182 = vld [vmem:[%s180 + $0x8] sm:$0xff]
    %v183 = vld [vmem:[%s180 + $0x10] sm:$0xff]
    %v184 = vld [vmem:[%s180 + $0x18] sm:$0xff]
    %v185 = vld [vmem:[%s180 + $0x20] sm:$0xff]
    %v186 = vld [vmem:[%s180 + $0x28] sm:$0xff]
    %v187 = vld [vmem:[%s180 + $0x30] sm:$0xff]
    %v188 = vld [vmem:[%s180 + $0x38] sm:$0xff]
    %v189 = vld [vmem:[%s180 + $0x40] sm:$0xff]
    %v190 = vld [vmem:[%s180 + $0x48] sm:$0xff]
    %v191 = vld [vmem:[%s180 + $0x50] sm:$0xff]
    %v192 = vld [vmem:[%s180 + $0x58] sm:$0xff]
    %v193 = vld [vmem:[%s180 + $0x60] sm:$0xff]
    %v194 = vld [vmem:[%s180 + $0x68] sm:$0xff]
    %v195 = vld [vmem:[%s180 + $0x70] sm:$0xff]
    %v196 = vld [vmem:[%s180 + $0x78] sm:$0xff]
    %s197 = scalar_lea.vmem %s4, 1
    %v198 = vld [vmem:[%s197] sm:$0x1]
    %v200 = vlaneseq
    %v201 = vshrl.u32 %v200, 7
    %v202 = vsub.s32 0, %v201
    %v203 = vrot.slane %v198, %v202
    %205 = vmatprep.subr.mxu0 0.0
    %206 = vmatpush1.msra.mxu0 %v196
    %207 = vmatprep.subr.mxu0 0.0
    %208 = vmatpush1.msra.mxu0 %v195
    %209 = vmatprep.subr.mxu0 0.0
    %210 = vmatpush1.msra.mxu0 %v194
    %211 = vmatprep.subr.mxu0 0.0
    %212 = vmatpush1.msra.mxu0 %v193
    %213 = vmatprep.subr.mxu0 0.0
    %214 = vmatpush1.msra.mxu0 %v192
    %215 = vmatprep.subr.mxu0 0.0
    %216 = vmatpush1.msra.mxu0 %v191
    %217 = vmatprep.subr.mxu0 0.0
    %218 = vmatpush1.msra.mxu0 %v190
    %219 = vmatprep.subr.mxu0 0.0
    %220 = vmatpush1.msra.mxu0 %v189
    %221 = vmatprep.subr.mxu0 0.0
    %222 = vmatpush1.msra.mxu0 %v188
    %223 = vmatprep.subr.mxu0 0.0
    %224 = vmatpush1.msra.mxu0 %v187
    %225 = vmatprep.subr.mxu0 0.0
    %226 = vmatpush1.msra.mxu0 %v186
    %227 = vmatprep.subr.mxu0 0.0
    %228 = vmatpush1.msra.mxu0 %v185
    %229 = vmatprep.subr.mxu0 0.0
    %230 = vmatpush1.msra.mxu0 %v184
    %231 = vmatprep.subr.mxu0 0.0
    %232 = vmatpush1.msra.mxu0 %v183
    %233 = vmatprep.subr.mxu0 0.0
    %234 = vmatpush1.msra.mxu0 %v182
    %235 = vmatprep.subr.mxu0 0.0
    %236 = vmatpush1.msra.mxu0 %v181
    %237 = vmatprep.subr.mxu0 0.0
    %238 = vmatpush2.msra.mxu0 0.0
    %239 = vmatprep.subr.mxu0 0.0
    %240 = vmatpush2.msra.mxu0 0.0
    %241 = vmatprep.subr.mxu0 0.0
    %242 = vmatpush2.msra.mxu0 0.0
    %243 = vmatprep.subr.mxu0 0.0
    %244 = vmatpush2.msra.mxu0 0.0
    %245 = vmatprep.subr.mxu0 0.0
    %246 = vmatpush2.msra.mxu0 0.0
    %247 = vmatprep.subr.mxu0 0.0
    %248 = vmatpush2.msra.mxu0 0.0
    %249 = vmatprep.subr.mxu0 0.0
    %250 = vmatpush2.msra.mxu0 0.0
    %251 = vmatprep.subr.mxu0 0.0
    %252 = vmatpush2.msra.mxu0 0.0
    %253 = vmatprep.subr.mxu0 0.0
    %254 = vmatpush2.msra.mxu0 0.0
    %255 = vmatprep.subr.mxu0 0.0
    %256 = vmatpush2.msra.mxu0 0.0
    %257 = vmatprep.subr.mxu0 0.0
    %258 = vmatpush2.msra.mxu0 0.0
    %259 = vmatprep.subr.mxu0 0.0
    %260 = vmatpush2.msra.mxu0 0.0
    %261 = vmatprep.subr.mxu0 0.0
    %262 = vmatpush2.msra.mxu0 0.0
    %263 = vmatprep.subr.mxu0 0.0
    %264 = vmatpush2.msra.mxu0 0.0
    %265 = vmatprep.subr.mxu0 0.0
    %266 = vmatpush2.msra.mxu0 0.0
    %267 = vmatprep.subr.mxu0 0.0
    %268 = vmatpush2.msra.mxu0 0.0
    %269 = vmatprep.mubr.f32.mxu0 0.0
    %270 = vmatmul.mubr.f32.gmra.mxu0 %v179
    %v271 = vpop.f32.mrf.mxu0
    %v272 = vadd.f32 %v203, %v271
    %v273 = vpop.f32.mrf.mxu0
    %274 = vdwg.mxu0
    %v275 = vmax.f32 %v272, 0.0
    %v276 = vadd.f32 %v179, %v275
    %s277 = scalar_lea.vmem [#allocation2], 256
    %v278 = vld [vmem:[%s277] sm:$0xff]
    %v279 = vld [vmem:[%s277 + $0x8] sm:$0xff]
    %v280 = vld [vmem:[%s277 + $0x10] sm:$0xff]
    %v281 = vld [vmem:[%s277 + $0x18] sm:$0xff]
    %v282 = vld [vmem:[%s277 + $0x20] sm:$0xff]
    %v283 = vld [vmem:[%s277 + $0x28] sm:$0xff]
    %v284 = vld [vmem:[%s277 + $0x30] sm:$0xff]
    %v285 = vld [vmem:[%s277 + $0x38] sm:$0xff]
    %v286 = vld [vmem:[%s277 + $0x40] sm:$0xff]
    %v287 = vld [vmem:[%s277 + $0x48] sm:$0xff]
    %v288 = vld [vmem:[%s277 + $0x50] sm:$0xff]
    %v289 = vld [vmem:[%s277 + $0x58] sm:$0xff]
    %v290 = vld [vmem:[%s277 + $0x60] sm:$0xff]
    %v291 = vld [vmem:[%s277 + $0x68] sm:$0xff]
    %v292 = vld [vmem:[%s277 + $0x70] sm:$0xff]
    %v293 = vld [vmem:[%s277 + $0x78] sm:$0xff]
    %s294 = scalar_lea.vmem %s4, 2
    %v295 = vld [vmem:[%s294] sm:$0x1]
    %v297 = vlaneseq
    %v298 = vshrl.u32 %v297, 7
    %v299 = vsub.s32 0, %v298
    %v300 = vrot.slane %v295, %v299
    %302 = vmatprep.subr.mxu0 0.0
    %303 = vmatpush1.msra.mxu0 %v293
    %304 = vmatprep.subr.mxu0 0.0
    %305 = vmatpush1.msra.mxu0 %v292
    %306 = vmatprep.subr.mxu0 0.0
    %307 = vmatpush1.msra.mxu0 %v291
    %308 = vmatprep.subr.mxu0 0.0
    %309 = vmatpush1.msra.mxu0 %v290
    %310 = vmatprep.subr.mxu0 0.0
    %311 = vmatpush1.msra.mxu0 %v289
    %312 = vmatprep.subr.mxu0 0.0
    %313 = vmatpush1.msra.mxu0 %v288
    %314 = vmatprep.subr.mxu0 0.0
    %315 = vmatpush1.msra.mxu0 %v287
    %316 = vmatprep.subr.mxu0 0.0
    %317 = vmatpush1.msra.mxu0 %v286
    %318 = vmatprep.subr.mxu0 0.0
    %319 = vmatpush1.msra.mxu0 %v285
    %320 = vmatprep.subr.mxu0 0.0
    %321 = vmatpush1.msra.mxu0 %v284
    %322 = vmatprep.subr.mxu0 0.0
    %323 = vmatpush1.msra.mxu0 %v283
    %324 = vmatprep.subr.mxu0 0.0
    %325 = vmatpush1.msra.mxu0 %v282
    %326 = vmatprep.subr.mxu0 0.0
    %327 = vmatpush1.msra.mxu0 %v281
    %328 = vmatprep.subr.mxu0 0.0
    %329 = vmatpush1.msra.mxu0 %v280
    %330 = vmatprep.subr.mxu0 0.0
    %331 = vmatpush1.msra.mxu0 %v279
    %332 = vmatprep.subr.mxu0 0.0
    %333 = vmatpush1.msra.mxu0 %v278
    %334 = vmatprep.subr.mxu0 0.0
    %335 = vmatpush2.msra.mxu0 0.0
    %336 = vmatprep.subr.mxu0 0.0
    %337 = vmatpush2.msra.mxu0 0.0
    %338 = vmatprep.subr.mxu0 0.0
    %339 = vmatpush2.msra.mxu0 0.0
    %340 = vmatprep.subr.mxu0 0.0
    %341 = vmatpush2.msra.mxu0 0.0
    %342 = vmatprep.subr.mxu0 0.0
    %343 = vmatpush2.msra.mxu0 0.0
    %344 = vmatprep.subr.mxu0 0.0
    %345 = vmatpush2.msra.mxu0 0.0
    %346 = vmatprep.subr.mxu0 0.0
    %347 = vmatpush2.msra.mxu0 0.0
    %348 = vmatprep.subr.mxu0 0.0
    %349 = vmatpush2.msra.mxu0 0.0
    %350 = vmatprep.subr.mxu0 0.0
    %351 = vmatpush2.msra.mxu0 0.0
    %352 = vmatprep.subr.mxu0 0.0
    %353 = vmatpush2.msra.mxu0 0.0
    %354 = vmatprep.subr.mxu0 0.0
    %355 = vmatpush2.msra.mxu0 0.0
    %356 = vmatprep.subr.mxu0 0.0
    %357 = vmatpush2.msra.mxu0 0.0
    %358 = vmatprep.subr.mxu0 0.0
    %359 = vmatpush2.msra.mxu0 0.0
    %360 = vmatprep.subr.mxu0 0.0
    %361 = vmatpush2.msra.mxu0 0.0
    %362 = vmatprep.subr.mxu0 0.0
    %363 = vmatpush2.msra.mxu0 0.0
    %364 = vmatprep.subr.mxu0 0.0
    %365 = vmatpush2.msra.mxu0 0.0
    %366 = vmatprep.mubr.f32.mxu0 0.0
    %367 = vmatmul.mubr.f32.gmra.mxu0 %v276
    %v368 = vpop.f32.mrf.mxu0
    %v369 = vadd.f32 %v300, %v368
    %v370 = vpop.f32.mrf.mxu0
    %371 = vdwg.mxu0
    %v372 = vmax.f32 %v369, 0.0
    %v373 = vadd.f32 %v276, %v372
    %s374 = scalar_lea.vmem [#allocation2], 384
    %v375 = vld [vmem:[%s374] sm:$0xff]
    %v376 = vld [vmem:[%s374 + $0x8] sm:$0xff]
    %v377 = vld [vmem:[%s374 + $0x10] sm:$0xff]
    %v378 = vld [vmem:[%s374 + $0x18] sm:$0xff]
    %v379 = vld [vmem:[%s374 + $0x20] sm:$0xff]
    %v380 = vld [vmem:[%s374 + $0x28] sm:$0xff]
    %v381 = vld [vmem:[%s374 + $0x30] sm:$0xff]
    %v382 = vld [vmem:[%s374 + $0x38] sm:$0xff]
    %v383 = vld [vmem:[%s374 + $0x40] sm:$0xff]
    %v384 = vld [vmem:[%s374 + $0x48] sm:$0xff]
    %v385 = vld [vmem:[%s374 + $0x50] sm:$0xff]
    %v386 = vld [vmem:[%s374 + $0x58] sm:$0xff]
    %v387 = vld [vmem:[%s374 + $0x60] sm:$0xff]
    %v388 = vld [vmem:[%s374 + $0x68] sm:$0xff]
    %v389 = vld [vmem:[%s374 + $0x70] sm:$0xff]
    %v390 = vld [vmem:[%s374 + $0x78] sm:$0xff]
    %s391 = scalar_lea.vmem %s4, 3
    %v392 = vld [vmem:[%s391] sm:$0x1]
    %v394 = vlaneseq
    %v395 = vshrl.u32 %v394, 7
    %v396 = vsub.s32 0, %v395
    %v397 = vrot.slane %v392, %v396
    %399 = vmatprep.subr.mxu0 0.0
    %400 = vmatpush1.msra.mxu0 %v390
    %401 = vmatprep.subr.mxu0 0.0
    %402 = vmatpush1.msra.mxu0 %v389
    %403 = vmatprep.subr.mxu0 0.0
    %404 = vmatpush1.msra.mxu0 %v388
    %405 = vmatprep.subr.mxu0 0.0
    %406 = vmatpush1.msra.mxu0 %v387
    %407 = vmatprep.subr.mxu0 0.0
    %408 = vmatpush1.msra.mxu0 %v386
    %409 = vmatprep.subr.mxu0 0.0
    %410 = vmatpush1.msra.mxu0 %v385
    %411 = vmatprep.subr.mxu0 0.0
    %412 = vmatpush1.msra.mxu0 %v384
    %413 = vmatprep.subr.mxu0 0.0
    %414 = vmatpush1.msra.mxu0 %v383
    %415 = vmatprep.subr.mxu0 0.0
    %416 = vmatpush1.msra.mxu0 %v382
    %417 = vmatprep.subr.mxu0 0.0
    %418 = vmatpush1.msra.mxu0 %v381
    %419 = vmatprep.subr.mxu0 0.0
    %420 = vmatpush1.msra.mxu0 %v380
    %421 = vmatprep.subr.mxu0 0.0
    %422 = vmatpush1.msra.mxu0 %v379
    %423 = vmatprep.subr.mxu0 0.0
    %424 = vmatpush1.msra.mxu0 %v378
    %425 = vmatprep.subr.mxu0 0.0
    %426 = vmatpush1.msra.mxu0 %v377
    %427 = vmatprep.subr.mxu0 0.0
    %428 = vmatpush1.msra.mxu0 %v376
    %429 = vmatprep.subr.mxu0 0.0
    %430 = vmatpush1.msra.mxu0 %v375
    %431 = vmatprep.subr.mxu0 0.0
    %432 = vmatpush2.msra.mxu0 0.0
    %433 = vmatprep.subr.mxu0 0.0
    %434 = vmatpush2.msra.mxu0 0.0
    %435 = vmatprep.subr.mxu0 0.0
    %436 = vmatpush2.msra.mxu0 0.0
    %437 = vmatprep.subr.mxu0 0.0
    %438 = vmatpush2.msra.mxu0 0.0
    %439 = vmatprep.subr.mxu0 0.0
    %440 = vmatpush2.msra.mxu0 0.0
    %441 = vmatprep.subr.mxu0 0.0
    %442 = vmatpush2.msra.mxu0 0.0
    %443 = vmatprep.subr.mxu0 0.0
    %444 = vmatpush2.msra.mxu0 0.0
    %445 = vmatprep.subr.mxu0 0.0
    %446 = vmatpush2.msra.mxu0 0.0
    %447 = vmatprep.subr.mxu0 0.0
    %448 = vmatpush2.msra.mxu0 0.0
    %449 = vmatprep.subr.mxu0 0.0
    %450 = vmatpush2.msra.mxu0 0.0
    %451 = vmatprep.subr.mxu0 0.0
    %452 = vmatpush2.msra.mxu0 0.0
    %453 = vmatprep.subr.mxu0 0.0
    %454 = vmatpush2.msra.mxu0 0.0
    %455 = vmatprep.subr.mxu0 0.0
    %456 = vmatpush2.msra.mxu0 0.0
    %457 = vmatprep.subr.mxu0 0.0
    %458 = vmatpush2.msra.mxu0 0.0
    %459 = vmatprep.subr.mxu0 0.0
    %460 = vmatpush2.msra.mxu0 0.0
    %461 = vmatprep.subr.mxu0 0.0
    %462 = vmatpush2.msra.mxu0 0.0
    %463 = vmatprep.mubr.f32.mxu0 0.0
    %464 = vmatmul.mubr.f32.gmra.mxu0 %v373
    %v465 = vpop.f32.mrf.mxu0
    %v466 = vadd.f32 %v397, %v465
    %v467 = vpop.f32.mrf.mxu0
    %468 = vdwg.mxu0
    %v469 = vmax.f32 %v466, 0.0
    %v470 = vadd.f32 %v373, %v469
    %v471 = vld [vmem:[#allocation5] sm:$0xff]
    %v472 = vld [vmem:[#allocation5 + $0x8] sm:$0xff]
    %v473 = vld [vmem:[#allocation5 + $0x10] sm:$0xff]
    %v474 = vld [vmem:[#allocation5 + $0x18] sm:$0xff]
    %v475 = vld [vmem:[#allocation5 + $0x20] sm:$0xff]
    %v476 = vld [vmem:[#allocation5 + $0x28] sm:$0xff]
    %v477 = vld [vmem:[#allocation5 + $0x30] sm:$0xff]
    %v478 = vld [vmem:[#allocation5 + $0x38] sm:$0xff]
    %v479 = vld [vmem:[#allocation5 + $0x40] sm:$0xff]
    %v480 = vld [vmem:[#allocation5 + $0x48] sm:$0xff]
    %v481 = vld [vmem:[#allocation5 + $0x50] sm:$0xff]
    %v482 = vld [vmem:[#allocation5 + $0x58] sm:$0xff]
    %v483 = vld [vmem:[#allocation5 + $0x60] sm:$0xff]
    %v484 = vld [vmem:[#allocation5 + $0x68] sm:$0xff]
    %v485 = vld [vmem:[#allocation5 + $0x70] sm:$0xff]
    %v486 = vld [vmem:[#allocation5 + $0x78] sm:$0xff]
    %v487 = vld [vmem:[%s6] sm:$0x1]
    %v489 = vlaneseq
    %v490 = vshrl.u32 %v489, 7
    %v491 = vsub.s32 0, %v490
    %v492 = vrot.slane %v487, %v491
    %494 = vmatprep.subr.mxu0 0.0
    %495 = vmatpush1.msra.mxu0 %v486
    %496 = vmatprep.subr.mxu0 0.0
    %497 = vmatpush1.msra.mxu0 %v485
    %498 = vmatprep.subr.mxu0 0.0
    %499 = vmatpush1.msra.mxu0 %v484
    %500 = vmatprep.subr.mxu0 0.0
    %501 = vmatpush1.msra.mxu0 %v483
    %502 = vmatprep.subr.mxu0 0.0
    %503 = vmatpush1.msra.mxu0 %v482
    %504 = vmatprep.subr.mxu0 0.0
    %505 = vmatpush1.msra.mxu0 %v481
    %506 = vmatprep.subr.mxu0 0.0
    %507 = vmatpush1.msra.mxu0 %v480
    %508 = vmatprep.subr.mxu0 0.0
    %509 = vmatpush1.msra.mxu0 %v479
    %510 = vmatprep.subr.mxu0 0.0
    %511 = vmatpush1.msra.mxu0 %v478
    %512 = vmatprep.subr.mxu0 0.0
    %513 = vmatpush1.msra.mxu0 %v477
    %514 = vmatprep.subr.mxu0 0.0
    %515 = vmatpush1.msra.mxu0 %v476
    %516 = vmatprep.subr.mxu0 0.0
    %517 = vmatpush1.msra.mxu0 %v475
    %518 = vmatprep.subr.mxu0 0.0
    %519 = vmatpush1.msra.mxu0 %v474
    %520 = vmatprep.subr.mxu0 0.0
    %521 = vmatpush1.msra.mxu0 %v473
    %522 = vmatprep.subr.mxu0 0.0
    %523 = vmatpush1.msra.mxu0 %v472
    %524 = vmatprep.subr.mxu0 0.0
    %525 = vmatpush1.msra.mxu0 %v471
    %526 = vmatprep.subr.mxu0 0.0
    %527 = vmatpush2.msra.mxu0 0.0
    %528 = vmatprep.subr.mxu0 0.0
    %529 = vmatpush2.msra.mxu0 0.0
    %530 = vmatprep.subr.mxu0 0.0
    %531 = vmatpush2.msra.mxu0 0.0
    %532 = vmatprep.subr.mxu0 0.0
    %533 = vmatpush2.msra.mxu0 0.0
    %534 = vmatprep.subr.mxu0 0.0
    %535 = vmatpush2.msra.mxu0 0.0
    %536 = vmatprep.subr.mxu0 0.0
    %537 = vmatpush2.msra.mxu0 0.0
    %538 = vmatprep.subr.mxu0 0.0
    %539 = vmatpush2.msra.mxu0 0.0
    %540 = vmatprep.subr.mxu0 0.0
    %541 = vmatpush2.msra.mxu0 0.0
    %542 = vmatprep.subr.mxu0 0.0
    %543 = vmatpush2.msra.mxu0 0.0
    %544 = vmatprep.subr.mxu0 0.0
    %545 = vmatpush2.msra.mxu0 0.0
    %546 = vmatprep.subr.mxu0 0.0
    %547 = vmatpush2.msra.mxu0 0.0
    %548 = vmatprep.subr.mxu0 0.0
    %549 = vmatpush2.msra.mxu0 0.0
    %550 = vmatprep.subr.mxu0 0.0
    %551 = vmatpush2.msra.mxu0 0.0
    %552 = vmatprep.subr.mxu0 0.0
    %553 = vmatpush2.msra.mxu0 0.0
    %554 = vmatprep.subr.mxu0 0.0
    %555 = vmatpush2.msra.mxu0 0.0
    %556 = vmatprep.subr.mxu0 0.0
    %557 = vmatpush2.msra.mxu0 0.0
    %558 = vmatprep.mubr.f32.mxu0 0.0
    %559 = vmatmul.mubr.f32.gmra.mxu0 %v470
    %v560 = vpop.f32.mrf.mxu0
    %v561 = vadd.f32 %v492, %v560
    %v562 = vpop.f32.mrf.mxu0
    %563 = vdwg.mxu0
    %564 = vst [vmem:[#allocation7] sm:$0xff] %v561
    // Predicated region
    $region38: #{tpu_custom_call.1} parent=1 // pred_check
      _
    $region39: #{tpu_custom_call.1} parent=1 // pred_check_branch
      %566 = sbr.rel (0) target = $region41
    $region40: #{tpu_custom_call.1} parent=1 // pred_region
      %s568 = ssub.s32 128, 128
      %569 = vsyncadd [#allocation4], %s568
      %s571 = sshll.u32 [#allocation7], 4
      %s572 = int_to_ptr.vmem [resolvable:$true] %s571
      %574 = dma.vmem_to_hbm [thread:$0]  %s572, 128, %s7, [#allocation4]
    $region41: #{tpu_custom_call.1} parent=1 // pred_fallthru
      _
    // Predicated region
    $region42: #{tpu_custom_call.1} parent=1 // pred_check
      _
    $region43: #{tpu_custom_call.1} parent=1 // pred_check_branch
      %576 = sbr.rel (0) target = $region45
    $region44: #{tpu_custom_call.1} parent=1 // pred_region
      %577 = dma.done [#allocation4], 128
    $region45: #{tpu_custom_call.1} parent=1 // pred_fallthru
      _
    %578 = vsyncpa [#allocation3], 1
    %579 = vsyncpa [#allocation6], 1
    %580 = vsyncpa [#allocation4], 1

</llo_original>
